<compile_context>
chip_gen: v7x
topology: tpu7x:2x2x1
jax: 0.10.0
libtpu: 0.0.40
codegen_flags: <defaults>
</compile_context>

<pallas_src>
import jax
import jax.numpy as jnp
from jax.experimental import pallas as pl
from jax.experimental.pallas import tpu as pltpu


IN_FEATURES = 42
H1 = 20
H2 = 10
OUT_FEATURES = 3

LANE = 128          # lane width of the weight slab
IN_PAD = 48         # W1 row-region padded to a multiple of 8 (keeps offsets aligned)
OUT_PAD = 8         # narrow output width (>= OUT_FEATURES, multiple of 8 sublane-wise)

# Row offsets inside the packed weight slab (all 8-aligned).
_W1_OFF = 0                       # rows [0, 48)    : W1  (42 real rows, [42, 20] data)
_W2_OFF = _W1_OFF + IN_PAD        # rows [48, 176)  : W2  ([20, 10] data)
_W3_OFF = _W2_OFF + LANE          # rows [176, 304) : W3  ([10, 3]  data)
_B_OFF = _W3_OFF + LANE           # rows [304, 312) : b1, b2, b3 (one row each)
SLAB_ROWS = _B_OFF + 8            # 312 rows (multiple of 8)


def mlp_kernel(x_ref, w_ref, o_ref):
    cdt = w_ref.dtype                                      # compute/stream dtype
    x = x_ref[...].astype(cdt)                             # [tile_b, 42], cast in VMEM

    w1 = w_ref[_W1_OFF:_W1_OFF + IN_FEATURES, :]           # [42, 128]
    w2 = w_ref[_W2_OFF:_W2_OFF + LANE, :]                  # [128, 128]
    w3 = w_ref[_W3_OFF:_W3_OFF + LANE, :]                  # [128, 128]
    b1 = w_ref[_B_OFF + 0:_B_OFF + 1, :]                   # [1, 128]
    b2 = w_ref[_B_OFF + 1:_B_OFF + 2, :]
    b3 = w_ref[_B_OFF + 2:_B_OFF + 3, :]

    # fc1 + ReLU  (MXU in compute dtype, f32 accumulation; padded cols stay 0)
    h = jnp.dot(x, w1, preferred_element_type=jnp.float32) + b1
    h = jnp.maximum(h, 0.0)

    # fc2 + ReLU
    h = jnp.dot(h.astype(cdt), w2, preferred_element_type=jnp.float32) + b2
    h = jnp.maximum(h, 0.0)

    # out (no activation); only the first OUT_PAD lanes are written back (lanes
    # 3..7 are exactly zero because the slab is zero-padded there).
    y = jnp.dot(h.astype(cdt), w3, preferred_element_type=jnp.float32) + b3
    o_ref[...] = y[:, :OUT_PAD].astype(o_ref.dtype)        # [tile_b, 8]


def pack_params(w1, b1, w2, b2, w3, b3):
    """Pack PyTorch-layout ([out, in]) weights into a zero-padded [312, 128] slab."""
    slab = jnp.zeros((SLAB_ROWS, LANE), jnp.float32)
    slab = slab.at[_W1_OFF:_W1_OFF + IN_FEATURES, :H1].set(jnp.asarray(w1).T)
    slab = slab.at[_W2_OFF:_W2_OFF + H1, :H2].set(jnp.asarray(w2).T)
    slab = slab.at[_W3_OFF:_W3_OFF + H2, :OUT_FEATURES].set(jnp.asarray(w3).T)
    slab = slab.at[_B_OFF + 0, :H1].set(b1)
    slab = slab.at[_B_OFF + 1, :H2].set(b2)
    slab = slab.at[_B_OFF + 2, :OUT_FEATURES].set(b3)
    return slab


def _round_up(n, m):
    return -(-n // m) * m


def mlp_forward(x, w1, b1, w2, b2, w3, b3, *,
                compute_dtype=jnp.bfloat16, tile_b_max=2048):
    """y = out(relu(fc2(relu(fc1(x)))));  x: [B, 42] -> [B, 3].

    compute_dtype=bf16 (default) streams weights / MXU inputs in bf16 with f32
    accumulation (~1e-2 relative error); compute_dtype=f32 is bit-exact.
    Weights are expected in PyTorch nn.Linear layout ([out_features, in_features]).
    """
    B = x.shape[0]
    tile_b_max = max(8, _round_up(tile_b_max, 8))

    # Batch tile: multiple of 8, capped by tile_b_max, and (when B >= 16) small
    # enough that the grid has >= 2 steps so v7x can use both TensorCores.
    tile_b = min(tile_b_max, max(8, _round_up((B + 1) // 2, 8)))
    B_pad = _round_up(B, tile_b)

    # Only pad the ragged batch tail (no feature padding, no dtype copy of x).
    x_in = x if B_pad == B else jnp.pad(x, ((0, B_pad - B), (0, 0)))

    slab = pack_params(w1, b1, w2, b2, w3, b3).astype(compute_dtype)

    x_itemsize = jnp.dtype(x.dtype).itemsize
    slab_itemsize = jnp.dtype(compute_dtype).itemsize
    cost = pl.CostEstimate(
        flops=2 * B_pad * (IN_FEATURES * H1 + H1 * H2 + H2 * OUT_FEATURES),
        transcendentals=0,
        bytes_accessed=(B_pad * IN_FEATURES * x_itemsize       # x stream
                        + SLAB_ROWS * LANE * slab_itemsize     # weight slab (once)
                        + B_pad * OUT_PAD * 4),                # narrow f32 output
    )

    out_padded = pl.pallas_call(
        mlp_kernel,
        out_shape=jax.ShapeDtypeStruct((B_pad, OUT_PAD), jnp.float32),
        grid=(B_pad // tile_b,),
        in_specs=[
            pl.BlockSpec((tile_b, IN_FEATURES), lambda i: (i, 0)),   # streamed x tile
            pl.BlockSpec((SLAB_ROWS, LANE), lambda i: (0, 0)),       # resident weights
        ],
        out_specs=pl.BlockSpec((tile_b, OUT_PAD), lambda i: (i, 0)),
        compiler_params=pltpu.CompilerParams(
            dimension_semantics=("parallel",)),                      # megacore on v7x
        cost_estimate=cost,
    )(x_in, slab)

    return out_padded[:B, :OUT_FEATURES].astype(x.dtype)


def init_params(key):
    """PyTorch-style init: nn.Linear layout [out, in], U(-1/sqrt(fan_in), 1/sqrt(fan_in))."""
    ks = jax.random.split(key, 6)

    def linear(kw, kb, fan_in, fan_out):
        bound = 1.0 / jnp.sqrt(fan_in)
        w = jax.random.uniform(kw, (fan_out, fan_in), jnp.float32, -bound, bound)
        b = jax.random.uniform(kb, (fan_out,), jnp.float32, -bound, bound)
        return w, b

    w1, b1 = linear(ks[0], ks[1], IN_FEATURES, H1)
    w2, b2 = linear(ks[2], ks[3], H1, H2)
    w3, b3 = linear(ks[4], ks[5], H2, OUT_FEATURES)
    return w1, b1, w2, b2, w3, b3


def reference_forward(x, w1, b1, w2, b2, w3, b3):
    h = jnp.maximum(x @ w1.T + b1, 0.0)
    h = jnp.maximum(h @ w2.T + b2, 0.0)
    return h @ w3.T + b3


if __name__ == "__main__":
    key = jax.random.PRNGKey(0)
    kx, kp = jax.random.split(key)
    params = init_params(kp)

    # Small batch, multiple of 8 (single grid step).
    B = 8
    x = jax.random.normal(kx, (B, IN_FEATURES), dtype=jnp.float32)
    ref = reference_forward(x, *params)

    out_bf16 = jax.block_until_ready(mlp_forward(x, *params))          # default bf16 stream
    assert out_bf16.shape == (B, OUT_FEATURES), out_bf16.shape
    assert jnp.allclose(out_bf16, ref, atol=3e-2, rtol=3e-2), "bf16 mismatch vs reference"

    out_f32 = jax.block_until_ready(
        mlp_forward(x, *params, compute_dtype=jnp.float32))            # exact path
    assert jnp.allclose(out_f32, ref, atol=1e-5, rtol=1e-5), "f32 mismatch vs reference"

    # Ragged batch (exercises batch-tail padding + a 2-step grid).
    B2 = 22
    x2 = jax.random.normal(jax.random.PRNGKey(1), (B2, IN_FEATURES), dtype=jnp.float32)
    ref2 = reference_forward(x2, *params)
    out2 = jax.block_until_ready(mlp_forward(x2, *params))
    assert out2.shape == (B2, OUT_FEATURES), out2.shape
    assert jnp.allclose(out2, ref2, atol=3e-2, rtol=3e-2), "ragged-batch mismatch vs reference"

    print("KERNEL_OK")
</pallas_src>

<mosaic_0001>
module attributes {stable_mosaic.version = 11 : i64} {
  func.func @mlp_kernel(%arg0: i32, %arg1: memref<8x42xf32, #tpu.memory_space<vmem>>, %arg2: memref<312x128xbf16, #tpu.memory_space<vmem>>, %arg3: memref<8x8xf32, #tpu.memory_space<vmem>>) attributes {dimension_semantics = [#tpu.dimension_semantics<parallel>], iteration_bounds = array<i64: 1>, scalar_prefetch = 0 : i64, scratch_operands = 0 : i64, tpu.core_type = #tpu.core_type<tc>, window_params = [{transform_indices = @transform_0, window_bounds = array<i64: 8, 42>}, {pipeline_mode = #tpu.pipeline_mode<synchronous>, transform_indices = @transform_1, window_bounds = array<i64: 312, 128>}, {transform_indices = @transform_2, window_bounds = array<i64: 8, 8>}]} {
    %c0 = arith.constant 0 : index
    %c0_0 = arith.constant 0 : index
    %0 = vector.load %arg1[%c0, %c0_0] : memref<8x42xf32, #tpu.memory_space<vmem>>, vector<8x42xf32>
    %1 = arith.truncf %0 : vector<8x42xf32> to vector<8x42xbf16>
    %c0_1 = arith.constant 0 : index
    %c0_2 = arith.constant 0 : index
    %2 = vector.load %arg2[%c0_1, %c0_2] : memref<312x128xbf16, #tpu.memory_space<vmem>>, vector<42x128xbf16>
    %c48 = arith.constant 48 : index
    %c0_3 = arith.constant 0 : index
    %3 = vector.load %arg2[%c48, %c0_3] : memref<312x128xbf16, #tpu.memory_space<vmem>>, vector<128x128xbf16>
    %c176 = arith.constant 176 : index
    %c0_4 = arith.constant 0 : index
    %4 = vector.load %arg2[%c176, %c0_4] : memref<312x128xbf16, #tpu.memory_space<vmem>>, vector<128x128xbf16>
    %c304 = arith.constant 304 : index
    %c0_5 = arith.constant 0 : index
    %5 = vector.load %arg2[%c304, %c0_5] : memref<312x128xbf16, #tpu.memory_space<vmem>>, vector<1x128xbf16>
    %c305 = arith.constant 305 : index
    %c0_6 = arith.constant 0 : index
    %6 = vector.load %arg2[%c305, %c0_6] : memref<312x128xbf16, #tpu.memory_space<vmem>>, vector<1x128xbf16>
    %c306 = arith.constant 306 : index
    %c0_7 = arith.constant 0 : index
    %7 = vector.load %arg2[%c306, %c0_7] : memref<312x128xbf16, #tpu.memory_space<vmem>>, vector<1x128xbf16>
    %cst = arith.constant dense<0.000000e+00> : vector<8x128xf32>
    %8 = tpu.matmul %1, %2, %cst {dimension_numbers = #tpu.dot_dimension_numbers<[1], [0], [0], [1], [0, 0, 1, 1], [], []>} : vector<8x42xbf16>, vector<42x128xbf16>, vector<8x128xf32> -> vector<8x128xf32>
    %9 = arith.extf %5 : vector<1x128xbf16> to vector<1x128xf32>
    %10 = vector.broadcast %9 : vector<1x128xf32> to vector<8x128xf32>
    %11 = arith.addf %8, %10 : vector<8x128xf32>
    %cst_8 = arith.constant 0.000000e+00 : f32
    %12 = vector.broadcast %cst_8 : f32 to vector<8x128xf32>
    %13 = arith.maximumf %11, %12 : vector<8x128xf32>
    %14 = arith.truncf %13 : vector<8x128xf32> to vector<8x128xbf16>
    %cst_9 = arith.constant dense<0.000000e+00> : vector<8x128xf32>
    %15 = tpu.matmul %14, %3, %cst_9 {dimension_numbers = #tpu.dot_dimension_numbers<[1], [0], [0], [1], [0, 0, 1, 1], [], []>} : vector<8x128xbf16>, vector<128x128xbf16>, vector<8x128xf32> -> vector<8x128xf32>
    %16 = arith.extf %6 : vector<1x128xbf16> to vector<1x128xf32>
    %17 = vector.broadcast %16 : vector<1x128xf32> to vector<8x128xf32>
    %18 = arith.addf %15, %17 : vector<8x128xf32>
    %cst_10 = arith.constant 0.000000e+00 : f32
    %19 = vector.broadcast %cst_10 : f32 to vector<8x128xf32>
    %20 = arith.maximumf %18, %19 : vector<8x128xf32>
    %21 = arith.truncf %20 : vector<8x128xf32> to vector<8x128xbf16>
    %cst_11 = arith.constant dense<0.000000e+00> : vector<8x128xf32>
    %22 = tpu.matmul %21, %4, %cst_11 {dimension_numbers = #tpu.dot_dimension_numbers<[1], [0], [0], [1], [0, 0, 1, 1], [], []>} : vector<8x128xbf16>, vector<128x128xbf16>, vector<8x128xf32> -> vector<8x128xf32>
    %23 = arith.extf %7 : vector<1x128xbf16> to vector<1x128xf32>
    %24 = vector.broadcast %23 : vector<1x128xf32> to vector<8x128xf32>
    %25 = arith.addf %22, %24 : vector<8x128xf32>
    %26 = vector.extract_strided_slice %25 {offsets = [0, 0], sizes = [8, 8], strides = [1, 1]} : vector<8x128xf32> to vector<8x8xf32>
    %c0_12 = arith.constant 0 : index
    %c0_13 = arith.constant 0 : index
    %27 = vector.load %arg3[%c0_12, %c0_13] : memref<8x8xf32, #tpu.memory_space<vmem>>, vector<8x8xf32>
    tpu.vector_store %arg3[%c0_12, %c0_13], %26 {strides = array<i32>} : memref<8x8xf32, #tpu.memory_space<vmem>>, vector<8x8xf32>,
    return
  }
  func.func @transform_0(%arg0: i32) -> (i32, i32) {
    %c0_i32 = arith.constant 0 : i32
    %c0_i32_0 = arith.constant 0 : i32
    return %arg0, %c0_i32 : i32, i32
  }
  func.func @transform_1(%arg0: i32) -> (i32, i32) {
    %c0_i32 = arith.constant 0 : i32
    %c0_i32_0 = arith.constant 0 : i32
    %c0_i32_1 = arith.constant 0 : i32
    return %c0_i32, %c0_i32_0 : i32, i32
  }
  func.func @transform_2(%arg0: i32) -> (i32, i32) {
    %c0_i32 = arith.constant 0 : i32
    %c0_i32_0 = arith.constant 0 : i32
    return %arg0, %c0_i32 : i32, i32
  }
}

</mosaic_0001>

<llo_original>
// kernel: tpu_custom_call.1
$region0: #{tpu_custom_call.1}
  #allocation0 [shape = 'u32[]', space=smem, size = 0x4, offset = 0x4, fixed_abs, tag = 'smem constant byte address 0x4 - core index']
  #allocation1 [shape = 'u32[144,128]{1,0:T(1,128)}', space=vmem, size = 0x12000, scoped, tag = 'internal scratch']
  %s0 = inlined_call_operand.hbm [shape: f32[8,42], index: 0, kind: input, shape index: {}]
  %s1 = inlined_call_operand.hbm [shape: bf16[312,128], index: 1, kind: input, shape index: {}]
  %s2 = inlined_call_operand.hbm [shape: f32[8,8], index: 2, kind: output, shape index: {}]
  %s3 = sld [smem:[#allocation0]]
  $region26: #{tpu_custom_call.1} parent=0
    _
  %s5 = ssub.s32 1, %s3
  %s6 = scalar_select 0, %s5, %s3
  $region1: #{tpu_custom_call.1} parent=0
    #allocation2 [shape = 'u8[4096]{0}', space=vmem, size = 0x1000, scoped, tag = 'input window, operand 0, single buffered']
    #allocation3 [shape = 's32[1]{0}', space=sflag, size = 0x4, scoped, tag = 'scoped memory for tpu_custom_call.1']
    #allocation4 [shape = 's32[1]{0}', space=sflag, size = 0x4, scoped, tag = 'scoped memory for tpu_custom_call.1']
    #allocation5 [shape = 'u8[79872]{0}', space=vmem, size = 0x13800, scoped, tag = 'input window, operand 1, single buffered']
    #allocation6 [shape = 's32[1]{0}', space=sflag, size = 0x4, scoped, tag = 'scoped memory for tpu_custom_call.1']
    #allocation7 [shape = 'u8[4096]{0}', space=vmem, size = 0x1000, scoped, tag = 'output window, operand 0, single buffered']
    %7 = vsyncpa [#allocation3], 0
    %8 = vsyncpa [#allocation6], 0
    %9 = vsyncpa [#allocation4], 0
    // Predicated region
    $region2: #{tpu_custom_call.1} parent=1 // pred_check
      _
    $region3: #{tpu_custom_call.1} parent=1 // pred_check_branch
      %11 = sbr.rel (0) target = $region5
    $region4: #{tpu_custom_call.1} parent=1 // pred_region
      %s13 = ssub.s32 128, 128
      %14 = vsyncadd [#allocation3], %s13
      %s16 = sshll.u32 [#allocation2], 4
      %s17 = int_to_ptr.vmem [resolvable:$true] %s16
      %19 = dma.hbm_to_vmem [thread:$0]  %s0, 128, %s17, [#allocation3]
    $region5: #{tpu_custom_call.1} parent=1 // pred_fallthru
      _
    // Predicated region
    $region6: #{tpu_custom_call.1} parent=1 // pred_check
      _
    $region7: #{tpu_custom_call.1} parent=1 // pred_check_branch
      %21 = sbr.rel (0) target = $region9
    $region8: #{tpu_custom_call.1} parent=1 // pred_region
      %s23 = ssub.s32 2496, 2496
      %24 = vsyncadd [#allocation6], %s23
      %s25 = sshll.u32 [#allocation5], 4
      %s26 = int_to_ptr.vmem [resolvable:$true] %s25
      %31 = dma.hbm_to_vmem [thread:$0]  %s1, 2496, %s26, [#allocation6], 64, 64, 4
    $region9: #{tpu_custom_call.1} parent=1 // pred_fallthru
      _
    // Predicated region
    $region10: #{tpu_custom_call.1} parent=1 // pred_check
      _
    $region11: #{tpu_custom_call.1} parent=1 // pred_check_branch
      %33 = sbr.rel (0) target = $region13
    $region12: #{tpu_custom_call.1} parent=1 // pred_region
      %34 = dma.done [#allocation3], 128
    $region13: #{tpu_custom_call.1} parent=1 // pred_fallthru
      _
    // Predicated region
    $region14: #{tpu_custom_call.1} parent=1 // pred_check
      _
    $region15: #{tpu_custom_call.1} parent=1 // pred_check_branch
      %36 = sbr.rel (0) target = $region17
    $region16: #{tpu_custom_call.1} parent=1 // pred_region
      %37 = dma.done [#allocation6], 2496
    $region17: #{tpu_custom_call.1} parent=1 // pred_fallthru
      _
    %v39 = vld [vmem:[#allocation2] sm:$0xff]
    %v40 = vpack.c.bf16 %v39, %v39
    %v41 = vld [vmem:[#allocation5] sm:$0xf]
    %v42 = vld [vmem:[#allocation5 + $0x4] sm:$0xf]
    %v43 = vld [vmem:[#allocation5 + $0x8] sm:$0xf]
    %v44 = vld [vmem:[#allocation5 + $0xc] sm:$0xf]
    %v45 = vld [vmem:[#allocation5 + $0x10] sm:$0xf]
    %v46 = vld [vmem:[#allocation5 + $0x14] sm:$0x1]
    %v47 = vld [vmem:[#allocation5 + $0x18] sm:$0xf]
    %v48 = vld [vmem:[#allocation5 + $0x1c] sm:$0xf]
    %v49 = vld [vmem:[#allocation5 + $0x20] sm:$0xf]
    %v50 = vld [vmem:[#allocation5 + $0x24] sm:$0xf]
    %v51 = vld [vmem:[#allocation5 + $0x28] sm:$0xf]
    %v52 = vld [vmem:[#allocation5 + $0x2c] sm:$0xf]
    %v53 = vld [vmem:[#allocation5 + $0x30] sm:$0xf]
    %v54 = vld [vmem:[#allocation5 + $0x34] sm:$0xf]
    %v55 = vld [vmem:[#allocation5 + $0x38] sm:$0xf]
    %v56 = vld [vmem:[#allocation5 + $0x3c] sm:$0xf]
    %v57 = vld [vmem:[#allocation5 + $0x40] sm:$0xf]
    %v58 = vld [vmem:[#allocation5 + $0x44] sm:$0xf]
    %v59 = vld [vmem:[#allocation5 + $0x48] sm:$0xf]
    %v60 = vld [vmem:[#allocation5 + $0x4c] sm:$0xf]
    %v61 = vld [vmem:[#allocation5 + $0x50] sm:$0xf]
    %v62 = vld [vmem:[#allocation5 + $0x54] sm:$0xf]
    %v63 = vld [vmem:[#allocation5 + $0x58] sm:$0xf]
    %v64 = vld [vmem:[#allocation5 + $0x5c] sm:$0xf]
    %v65 = vld [vmem:[#allocation5 + $0x60] sm:$0xf]
    %v66 = vld [vmem:[#allocation5 + $0x64] sm:$0xf]
    %v67 = vld [vmem:[#allocation5 + $0x68] sm:$0xf]
    %v68 = vld [vmem:[#allocation5 + $0x6c] sm:$0xf]
    %v69 = vld [vmem:[#allocation5 + $0x70] sm:$0xf]
    %v70 = vld [vmem:[#allocation5 + $0x74] sm:$0xf]
    %v71 = vld [vmem:[#allocation5 + $0x78] sm:$0xf]
    %v72 = vld [vmem:[#allocation5 + $0x7c] sm:$0xf]
    %v73 = vld [vmem:[#allocation5 + $0x80] sm:$0xf]
    %v74 = vld [vmem:[#allocation5 + $0x84] sm:$0xf]
    %v75 = vld [vmem:[#allocation5 + $0x88] sm:$0xf]
    %v76 = vld [vmem:[#allocation5 + $0x8c] sm:$0xf]
    %v77 = vld [vmem:[#allocation5 + $0x90] sm:$0xf]
    %v78 = vld [vmem:[#allocation5 + $0x94] sm:$0xf]
    %v79 = vld [vmem:[#allocation5 + $0x98] sm:$0x1]
    %v80 = vld [vmem:[#allocation5 + $0x98] sm:$0x2]
    %v81 = vunpack.c.l.bf16 %v79
    %v82 = vlaneseq
    %v83 = vshrl.u32 %v82, 7
    %v84 = vsub.s32 0, %v83
    %v85 = vrot.slane %v81, %v84
    %v92 = vunpack.c.l.b16 %v41
    %v93 = vunpack.c.l.b16 %v42
    %v94 = vunpack.c.l.b16 %v43
    %v95 = vunpack.c.l.b16 %v44
    %v96 = vunpack.c.l.b16 %v45
    %v97 = vunpack.c.l.b16 %v46
    %v98 = vpack.c.b16 %v93, %v92
    %v99 = vpack.c.b16 %v95, %v94
    %v100 = vpack.c.b16 %v97, %v96
    %vm103 = vcmask 343040
    %v105 = vsel %vm103, %v40, 0
    %vm107 = vcmask 1044480
    %v109 = vsel %vm107, %v100, 0
    %111 = vmatprep.subr.bf16.mxu0 0
    %112 = vmatpush1.bf16.msra.mxu0 %v98
    %113 = vmatprep.subr.bf16.mxu0 0
    %114 = vmatpush1.bf16.msra.mxu0 %v99
    %115 = vmatprep.subr.bf16.mxu0 0
    %116 = vmatpush1.bf16.msra.mxu0 %v109
    %117 = vmatprep.subr.bf16.mxu0 0
    %118 = vmatpush1.bf16.msra.mxu0 0
    %119 = vmatprep.subr.bf16.mxu0 0
    %120 = vmatpush1.bf16.msra.mxu0 0
    %121 = vmatprep.subr.bf16.mxu0 0
    %122 = vmatpush1.bf16.msra.mxu0 0
    %123 = vmatprep.subr.bf16.mxu0 0
    %124 = vmatpush1.bf16.msra.mxu0 0
    %125 = vmatprep.subr.bf16.mxu0 0
    %126 = vmatpush1.bf16.msra.mxu0 0
    %127 = vmatprep.subr.bf16.mxu0 0
    %128 = vmatpush1.bf16.msra.mxu0 0
    %129 = vmatprep.subr.bf16.mxu0 0
    %130 = vmatpush1.bf16.msra.mxu0 0
    %131 = vmatprep.subr.bf16.mxu0 0
    %132 = vmatpush1.bf16.msra.mxu0 0
    %133 = vmatprep.subr.bf16.mxu0 0
    %134 = vmatpush1.bf16.msra.mxu0 0
    %135 = vmatprep.subr.bf16.mxu0 0
    %136 = vmatpush1.bf16.msra.mxu0 0
    %137 = vmatprep.subr.bf16.mxu0 0
    %138 = vmatpush1.bf16.msra.mxu0 0
    %139 = vmatprep.subr.bf16.mxu0 0
    %140 = vmatpush1.bf16.msra.mxu0 0
    %141 = vmatprep.subr.bf16.mxu0 0
    %142 = vmatpush1.bf16.msra.mxu0 0
    %143 = vmatprep.mubr.bf16.mxu0 0
    %144 = vmatmul.mubr.bf16.gmra.mrb[0].mxu0 %v105
    %v145 = vpop.f32.mrb[0].mxu0
    %v146 = vadd.f32 %v85, %v145
    %v147 = vpop.f32.mrb[0].mxu0
    %v148 = vpop.f32.mrb[0].mxu0
    %v149 = vpop.f32.mrb[0].mxu0
    %150 = vdwg.mxu0
    %v151 = vmax.f32 %v146, 0.0
    %v152 = vpack.c.bf16 %v151, %v151
    %v153 = vlaneseq
    %v154 = vshrl.u32 %v153, 7
    %v155 = vsub.s32 1, %v154
    %v156 = vrot.slane %v81, %v155
    %v173 = vunpack.c.l.b16 %v47
    %v174 = vunpack.c.l.b16 %v48
    %v175 = vunpack.c.l.b16 %v49
    %v176 = vunpack.c.l.b16 %v50
    %v177 = vunpack.c.l.b16 %v51
    %v178 = vunpack.c.l.b16 %v52
    %v179 = vunpack.c.l.b16 %v53
    %v180 = vunpack.c.l.b16 %v54
    %v181 = vunpack.c.l.b16 %v55
    %v182 = vunpack.c.l.b16 %v56
    %v183 = vunpack.c.l.b16 %v57
    %v184 = vunpack.c.l.b16 %v58
    %v185 = vunpack.c.l.b16 %v59
    %v186 = vunpack.c.l.b16 %v60
    %v187 = vunpack.c.l.b16 %v61
    %v188 = vunpack.c.l.b16 %v62
    %v189 = vpack.c.b16 %v174, %v173
    %v190 = vpack.c.b16 %v176, %v175
    %v191 = vpack.c.b16 %v178, %v177
    %v192 = vpack.c.b16 %v180, %v179
    %v193 = vpack.c.b16 %v182, %v181
    %v194 = vpack.c.b16 %v184, %v183
    %v195 = vpack.c.b16 %v186, %v185
    %v196 = vpack.c.b16 %v188, %v187
    %205 = vmatprep.subr.bf16.mxu0 0
    %206 = vmatpush1.bf16.msra.mxu0 %v189
    %207 = vmatprep.subr.bf16.mxu0 0
    %208 = vmatpush1.bf16.msra.mxu0 %v190
    %209 = vmatprep.subr.bf16.mxu0 0
    %210 = vmatpush1.bf16.msra.mxu0 %v191
    %211 = vmatprep.subr.bf16.mxu0 0
    %212 = vmatpush1.bf16.msra.mxu0 %v192
    %213 = vmatprep.subr.bf16.mxu0 0
    %214 = vmatpush1.bf16.msra.mxu0 %v193
    %215 = vmatprep.subr.bf16.mxu0 0
    %216 = vmatpush1.bf16.msra.mxu0 %v194
    %217 = vmatprep.subr.bf16.mxu0 0
    %218 = vmatpush1.bf16.msra.mxu0 %v195
    %219 = vmatprep.subr.bf16.mxu0 0
    %220 = vmatpush1.bf16.msra.mxu0 %v196
    %221 = vmatprep.subr.bf16.mxu0 0
    %222 = vmatpush1.bf16.msra.mxu0 0
    %223 = vmatprep.subr.bf16.mxu0 0
    %224 = vmatpush1.bf16.msra.mxu0 0
    %225 = vmatprep.subr.bf16.mxu0 0
    %226 = vmatpush1.bf16.msra.mxu0 0
    %227 = vmatprep.subr.bf16.mxu0 0
    %228 = vmatpush1.bf16.msra.mxu0 0
    %229 = vmatprep.subr.bf16.mxu0 0
    %230 = vmatpush1.bf16.msra.mxu0 0
    %231 = vmatprep.subr.bf16.mxu0 0
    %232 = vmatpush1.bf16.msra.mxu0 0
    %233 = vmatprep.subr.bf16.mxu0 0
    %234 = vmatpush1.bf16.msra.mxu0 0
    %235 = vmatprep.subr.bf16.mxu0 0
    %236 = vmatpush1.bf16.msra.mxu0 0
    %237 = vmatprep.mubr.bf16.mxu0 0
    %238 = vmatmul.mubr.bf16.gmra.mrb[0].mxu0 %v152
    %v239 = vpop.f32.mrb[0].mxu0
    %v240 = vadd.f32 %v156, %v239
    %v241 = vpop.f32.mrb[0].mxu0
    %v242 = vpop.f32.mrb[0].mxu0
    %v243 = vpop.f32.mrb[0].mxu0
    %244 = vdwg.mxu0
    %v245 = vmax.f32 %v240, 0.0
    %v246 = vpack.c.bf16 %v245, %v245
    %v247 = vunpack.c.l.bf16 %v80
    %v248 = vlaneseq
    %v249 = vshrl.u32 %v248, 7
    %v250 = vsub.s32 2, %v249
    %v251 = vrot.slane %v247, %v250
    %v268 = vunpack.c.l.b16 %v63
    %v269 = vunpack.c.l.b16 %v64
    %v270 = vunpack.c.l.b16 %v65
    %v271 = vunpack.c.l.b16 %v66
    %v272 = vunpack.c.l.b16 %v67
    %v273 = vunpack.c.l.b16 %v68
    %v274 = vunpack.c.l.b16 %v69
    %v275 = vunpack.c.l.b16 %v70
    %v276 = vunpack.c.l.b16 %v71
    %v277 = vunpack.c.l.b16 %v72
    %v278 = vunpack.c.l.b16 %v73
    %v279 = vunpack.c.l.b16 %v74
    %v280 = vunpack.c.l.b16 %v75
    %v281 = vunpack.c.l.b16 %v76
    %v282 = vunpack.c.l.b16 %v77
    %v283 = vunpack.c.l.b16 %v78
    %v284 = vpack.c.b16 %v269, %v268
    %v285 = vpack.c.b16 %v271, %v270
    %v286 = vpack.c.b16 %v273, %v272
    %v287 = vpack.c.b16 %v275, %v274
    %v288 = vpack.c.b16 %v277, %v276
    %v289 = vpack.c.b16 %v279, %v278
    %v290 = vpack.c.b16 %v281, %v280
    %v291 = vpack.c.b16 %v283, %v282
    %300 = vmatprep.subr.bf16.mxu0 0
    %301 = vmatpush1.bf16.msra.mxu0 %v284
    %302 = vmatprep.subr.bf16.mxu0 0
    %303 = vmatpush1.bf16.msra.mxu0 %v285
    %304 = vmatprep.subr.bf16.mxu0 0
    %305 = vmatpush1.bf16.msra.mxu0 %v286
    %306 = vmatprep.subr.bf16.mxu0 0
    %307 = vmatpush1.bf16.msra.mxu0 %v287
    %308 = vmatprep.subr.bf16.mxu0 0
    %309 = vmatpush1.bf16.msra.mxu0 %v288
    %310 = vmatprep.subr.bf16.mxu0 0
    %311 = vmatpush1.bf16.msra.mxu0 %v289
    %312 = vmatprep.subr.bf16.mxu0 0
    %313 = vmatpush1.bf16.msra.mxu0 %v290
    %314 = vmatprep.subr.bf16.mxu0 0
    %315 = vmatpush1.bf16.msra.mxu0 %v291
    %316 = vmatprep.subr.bf16.mxu0 0
    %317 = vmatpush1.bf16.msra.mxu0 0
    %318 = vmatprep.subr.bf16.mxu0 0
    %319 = vmatpush1.bf16.msra.mxu0 0
    %320 = vmatprep.subr.bf16.mxu0 0
    %321 = vmatpush1.bf16.msra.mxu0 0
    %322 = vmatprep.subr.bf16.mxu0 0
    %323 = vmatpush1.bf16.msra.mxu0 0
    %324 = vmatprep.subr.bf16.mxu0 0
    %325 = vmatpush1.bf16.msra.mxu0 0
    %326 = vmatprep.subr.bf16.mxu0 0
    %327 = vmatpush1.bf16.msra.mxu0 0
    %328 = vmatprep.subr.bf16.mxu0 0
    %329 = vmatpush1.bf16.msra.mxu0 0
    %330 = vmatprep.subr.bf16.mxu0 0
    %331 = vmatpush1.bf16.msra.mxu0 0
    %332 = vmatprep.mubr.bf16.mxu0 0
    %333 = vmatmul.mubr.bf16.gmra.mrb[0].mxu0 %v246
    %v334 = vpop.f32.mrb[0].mxu0
    %v335 = vadd.f32 %v251, %v334
    %v336 = vpop.f32.mrb[0].mxu0
    %v337 = vpop.f32.mrb[0].mxu0
    %v338 = vpop.f32.mrb[0].mxu0
    %339 = vdwg.mxu0
    %vm340 = vcmask 64512
    %341 = vst.msk [vmem:[#allocation7] sm:$0xff] %vm340, %v335
    // Predicated region
    $region18: #{tpu_custom_call.1} parent=1 // pred_check
      _
    $region19: #{tpu_custom_call.1} parent=1 // pred_check_branch
      %343 = sbr.rel (0) target = $region21
    $region20: #{tpu_custom_call.1} parent=1 // pred_region
      %s345 = ssub.s32 128, 128
      %346 = vsyncadd [#allocation4], %s345
      %s348 = sshll.u32 [#allocation7], 4
      %s349 = int_to_ptr.vmem [resolvable:$true] %s348
      %351 = dma.vmem_to_hbm [thread:$0]  %s349, 128, %s2, [#allocation4]
    $region21: #{tpu_custom_call.1} parent=1 // pred_fallthru
      _
    // Predicated region
    $region22: #{tpu_custom_call.1} parent=1 // pred_check
      _
    $region23: #{tpu_custom_call.1} parent=1 // pred_check_branch
      %353 = sbr.rel (0) target = $region25
    $region24: #{tpu_custom_call.1} parent=1 // pred_region
      %354 = dma.done [#allocation4], 128
    $region25: #{tpu_custom_call.1} parent=1 // pred_fallthru
      _
    %355 = vsyncpa [#allocation3], 1
    %356 = vsyncpa [#allocation6], 1
    %357 = vsyncpa [#allocation4], 1

</llo_original>
